<compile_context>
chip_gen: v7x
topology: tpu7x:2x2x1
jax: 0.10.0
libtpu: 0.0.40
codegen_flags: <defaults>
</compile_context>

<pallas_src>
import jax
import jax.numpy as jnp
from jax.experimental import pallas as pl
from jax.experimental.pallas import tpu as pltpu


def _round_up(v, m):
    return (v + m - 1) // m * m


def linear_kernel(x_ref, w_ref, b_ref, o_ref):
    # x_ref: (TILE_N, F) bf16   w_ref: (F, C_PAD) bf16
    # b_ref: (1, C_PAD) f32     o_ref: (TILE_N, C_PAD) f32 (lane-dense store)
    acc = jnp.dot(x_ref[...], w_ref[...], preferred_element_type=jnp.float32)
    o_ref[...] = (acc + b_ref[...]).astype(o_ref.dtype)


def linear_forward(x, weight, bias, *, max_tile_n=1024):
    """Pallas equivalent of LinearNeuralNetwork.forward: x @ weight.T + bias.

    x:      (N, F) float32
    weight: (C, F) float32   (torch.nn.Linear layout: (out_features, in_features))
    bias:   (C,)   float32
    returns (N, C) float32
    """
    N, F = x.shape
    C = weight.shape[0]

    # Lane-dense output: pad classes to a multiple of 128 so the output write is
    # a full unmasked vector store instead of masked vst.msk partial stores.
    c_pad = _round_up(C, 128)

    # Row tiling: one grid step for small N; large (roofline-friendly) tiles for
    # graph-scale N.  Tiles are 8-sublane aligned; N is padded so the grid
    # divides evenly (no tail handling needed in-kernel).
    tile_n = min(max_tile_n, _round_up(N, 8))
    n_pad = _round_up(N, tile_n)
    grid_n = n_pad // tile_n

    # bf16 inputs halve HBM bytes for the dominant traffic term (x); the MXU
    # still accumulates in f32 via preferred_element_type.
    x_p = jnp.zeros((n_pad, F), jnp.bfloat16).at[:N, :].set(x.astype(jnp.bfloat16))
    w_t = jnp.zeros((F, c_pad), jnp.bfloat16).at[:, :C].set(
        weight.T.astype(jnp.bfloat16))
    b_p = jnp.zeros((1, c_pad), jnp.float32).at[0, :C].set(
        bias.astype(jnp.float32))

    # VMEM budget: 2x (double-buffered) x/out tiles + resident W/b + headroom,
    # capped well below v7x's 64 MiB physical VMEM (also covers v5e's 16 MiB
    # scoped default when tile_n is raised).
    x_tile_bytes = tile_n * F * 2
    o_tile_bytes = tile_n * c_pad * 4
    resident_bytes = F * c_pad * 2 + c_pad * 4
    needed = 2 * (x_tile_bytes + o_tile_bytes) + 2 * resident_bytes + (1 << 20)
    vmem_limit = int(min(max(needed, 4 << 20), 48 << 20))

    grid_spec = pltpu.PrefetchScalarGridSpec(
        num_scalar_prefetch=0,
        grid=(grid_n,),
        in_specs=[
            pl.BlockSpec((tile_n, F), lambda i: (i, 0)),   # x row tile
            pl.BlockSpec((F, c_pad), lambda i: (0, 0)),    # full weight, resident
            pl.BlockSpec((1, c_pad), lambda i: (0, 0)),    # bias, resident
        ],
        out_specs=pl.BlockSpec((tile_n, c_pad), lambda i: (i, 0)),
    )

    cost = pl.CostEstimate(
        flops=2 * n_pad * F * c_pad,
        transcendentals=0,
        bytes_accessed=(x_p.size * 2 + w_t.size * 2 + b_p.size * 4
                        + n_pad * c_pad * 4),
    )

    out = pl.pallas_call(
        linear_kernel,
        out_shape=jax.ShapeDtypeStruct((n_pad, c_pad), jnp.float32),
        grid_spec=grid_spec,
        compiler_params=pltpu.CompilerParams(
            # Row axis is embarrassingly parallel -> shards across v7x's two
            # TensorCores once grid_n >= 2 (real graph-scale N).
            dimension_semantics=("parallel",),
            vmem_limit_bytes=vmem_limit,
        ),
        cost_estimate=cost,
    )(x_p, w_t, b_p)

    return out[:N, :C]


if __name__ == "__main__":
    # Small shapes consistent with the module: num_nodes x num_features -> num_classes
    N, F, C = 128, 64, 16

    key = jax.random.PRNGKey(0)
    kx, kw, kb = jax.random.split(key, 3)

    # Deterministic parameter init mimicking torch.nn.Linear default:
    # uniform(-1/sqrt(F), 1/sqrt(F)) for weight and bias.
    bound = 1.0 / (F ** 0.5)
    x = jax.random.normal(kx, (N, F), dtype=jnp.float32)
    weight = jax.random.uniform(kw, (C, F), minval=-bound, maxval=bound,
                                dtype=jnp.float32)   # torch layout (out, in)
    bias = jax.random.uniform(kb, (C,), minval=-bound, maxval=bound,
                              dtype=jnp.float32)

    out = linear_forward(x, weight, bias)
    out = jax.block_until_ready(out)

    # Correctness check vs plain-JAX reference of torch.nn.Linear semantics.
    # bf16 inputs -> loosened tolerance vs the f32 reference.
    ref = x @ weight.T + bias
    assert out.shape == (N, C)
    assert jnp.allclose(out, ref, atol=3e-2, rtol=3e-2), "mismatch vs reference"

    # TODO(synk): test()/update_W() (masked MSE, argmax accuracy, SGD step) are
    # training/eval host-side utilities, not part of the forward pass kernel.
    print("KERNEL_OK")
</pallas_src>

<mosaic_0001>
module attributes {stable_mosaic.version = 11 : i64} {
  func.func @linear_kernel(%arg0: i32, %arg1: memref<128x64xbf16, #tpu.memory_space<vmem>>, %arg2: memref<64x128xbf16, #tpu.memory_space<vmem>>, %arg3: memref<1x128xf32, #tpu.memory_space<vmem>>, %arg4: memref<128x128xf32, #tpu.memory_space<vmem>>) attributes {dimension_semantics = [#tpu.dimension_semantics<parallel>], iteration_bounds = array<i64: 1>, scalar_prefetch = 0 : i64, scratch_operands = 0 : i64, tpu.core_type = #tpu.core_type<tc>, window_params = [{transform_indices = @transform_0, window_bounds = array<i64: 128, 64>}, {pipeline_mode = #tpu.pipeline_mode<synchronous>, transform_indices = @transform_1, window_bounds = array<i64: 64, 128>}, {pipeline_mode = #tpu.pipeline_mode<synchronous>, transform_indices = @transform_2, window_bounds = array<i64: 1, 128>}, {transform_indices = @transform_3, window_bounds = array<i64: 128, 128>}]} {
    %c0 = arith.constant 0 : index
    %c0_0 = arith.constant 0 : index
    %0 = vector.load %arg1[%c0, %c0_0] : memref<128x64xbf16, #tpu.memory_space<vmem>>, vector<128x64xbf16>
    %c0_1 = arith.constant 0 : index
    %c0_2 = arith.constant 0 : index
    %1 = vector.load %arg2[%c0_1, %c0_2] : memref<64x128xbf16, #tpu.memory_space<vmem>>, vector<64x128xbf16>
    %cst = arith.constant dense<0.000000e+00> : vector<128x128xf32>
    %2 = tpu.matmul %0, %1, %cst {dimension_numbers = #tpu.dot_dimension_numbers<[1], [0], [0], [1], [0, 0, 1, 1], [], []>} : vector<128x64xbf16>, vector<64x128xbf16>, vector<128x128xf32> -> vector<128x128xf32>
    %c0_3 = arith.constant 0 : index
    %c0_4 = arith.constant 0 : index
    %3 = vector.load %arg3[%c0_3, %c0_4] : memref<1x128xf32, #tpu.memory_space<vmem>>, vector<1x128xf32>
    %4 = vector.broadcast %3 : vector<1x128xf32> to vector<128x128xf32>
    %5 = arith.addf %2, %4 : vector<128x128xf32>
    %c0_5 = arith.constant 0 : index
    %c0_6 = arith.constant 0 : index
    %6 = vector.load %arg4[%c0_5, %c0_6] : memref<128x128xf32, #tpu.memory_space<vmem>>, vector<128x128xf32>
    tpu.vector_store %arg4[%c0_5, %c0_6], %5 {strides = array<i32>} : memref<128x128xf32, #tpu.memory_space<vmem>>, vector<128x128xf32>,
    return
  }
  func.func @transform_0(%arg0: i32) -> (i32, i32) {
    %c0_i32 = arith.constant 0 : i32
    %c0_i32_0 = arith.constant 0 : i32
    return %arg0, %c0_i32 : i32, i32
  }
  func.func @transform_1(%arg0: i32) -> (i32, i32) {
    %c0_i32 = arith.constant 0 : i32
    %c0_i32_0 = arith.constant 0 : i32
    %c0_i32_1 = arith.constant 0 : i32
    return %c0_i32, %c0_i32_0 : i32, i32
  }
  func.func @transform_2(%arg0: i32) -> (i32, i32) {
    %c0_i32 = arith.constant 0 : i32
    %c0_i32_0 = arith.constant 0 : i32
    %c0_i32_1 = arith.constant 0 : i32
    return %c0_i32, %c0_i32_0 : i32, i32
  }
  func.func @transform_3(%arg0: i32) -> (i32, i32) {
    %c0_i32 = arith.constant 0 : i32
    %c0_i32_0 = arith.constant 0 : i32
    return %arg0, %c0_i32 : i32, i32
  }
}

</mosaic_0001>

<llo_original>
// kernel: tpu_custom_call.1
$region0: #{tpu_custom_call.1}
  #allocation0 [shape = 'u32[]', space=smem, size = 0x4, offset = 0x4, fixed_abs, tag = 'smem constant byte address 0x4 - core index']
  #allocation1 [shape = 'u32[144,128]{1,0:T(1,128)}', space=vmem, size = 0x12000, scoped, tag = 'internal scratch']
  %s0 = inlined_call_operand.vmem [shape: bf16[128,64], index: 0, kind: input, shape index: {}]
  %s1 = inlined_call_operand.vmem [shape: bf16[64,128], index: 1, kind: input, shape index: {}]
  %s2 = inlined_call_operand.vmem [shape: f32[1,128], index: 2, kind: input, shape index: {}]
  %s3 = inlined_call_operand.hbm [shape: f32[128,128], index: 3, kind: output, shape index: {}]
  %s4 = sld [smem:[#allocation0]]
  $region22: #{tpu_custom_call.1} parent=0
    _
  %s6 = ssub.s32 1, %s4
  %s7 = scalar_select 0, %s6, %s4
  $region1: #{tpu_custom_call.1} parent=0
    #allocation2 [shape = 'u8[65536]{0}', space=vmem, size = 0x10000, scoped, tag = 'output window, operand 0, single buffered']
    #allocation3 [shape = 's32[1]{0}', space=sflag, size = 0x4, scoped, tag = 'scoped memory for tpu_custom_call.1']
    %8 = vsyncpa [#allocation3], 0
    // Predicated region
    $region2: #{tpu_custom_call.1} parent=1 // pred_check
      _
    $region3: #{tpu_custom_call.1} parent=1 // pred_check_branch
      %10 = sbr.rel (0) target = $region5
    $region4: #{tpu_custom_call.1} parent=1 // pred_region
      _
    $region5: #{tpu_custom_call.1} parent=1 // pred_fallthru
      _
    // Predicated region
    $region6: #{tpu_custom_call.1} parent=1 // pred_check
      _
    $region7: #{tpu_custom_call.1} parent=1 // pred_check_branch
      %12 = sbr.rel (0) target = $region9
    $region8: #{tpu_custom_call.1} parent=1 // pred_region
      _
    $region9: #{tpu_custom_call.1} parent=1 // pred_fallthru
      _
    // Predicated region
    $region10: #{tpu_custom_call.1} parent=1 // pred_check
      _
    $region11: #{tpu_custom_call.1} parent=1 // pred_check_branch
      %14 = sbr.rel (0) target = $region13
    $region12: #{tpu_custom_call.1} parent=1 // pred_region
      _
    $region13: #{tpu_custom_call.1} parent=1 // pred_fallthru
      _
    %v16 = vld [vmem:[%s0] sm:$0xf]
    %v17 = vld [vmem:[%s0 + $0x4] sm:$0xf]
    %v18 = vld [vmem:[%s0 + $0x8] sm:$0xf]
    %v19 = vld [vmem:[%s0 + $0xc] sm:$0xf]
    %v20 = vld [vmem:[%s0 + $0x10] sm:$0xf]
    %v21 = vld [vmem:[%s0 + $0x14] sm:$0xf]
    %v22 = vld [vmem:[%s0 + $0x18] sm:$0xf]
    %v23 = vld [vmem:[%s0 + $0x1c] sm:$0xf]
    %v24 = vld [vmem:[%s0 + $0x20] sm:$0xf]
    %v25 = vld [vmem:[%s0 + $0x24] sm:$0xf]
    %v26 = vld [vmem:[%s0 + $0x28] sm:$0xf]
    %v27 = vld [vmem:[%s0 + $0x2c] sm:$0xf]
    %v28 = vld [vmem:[%s0 + $0x30] sm:$0xf]
    %v29 = vld [vmem:[%s0 + $0x34] sm:$0xf]
    %v30 = vld [vmem:[%s0 + $0x38] sm:$0xf]
    %v31 = vld [vmem:[%s0 + $0x3c] sm:$0xf]
    %v32 = vld [vmem:[%s1] sm:$0xf]
    %v33 = vld [vmem:[%s1 + $0x4] sm:$0xf]
    %v34 = vld [vmem:[%s1 + $0x8] sm:$0xf]
    %v35 = vld [vmem:[%s1 + $0xc] sm:$0xf]
    %v36 = vld [vmem:[%s1 + $0x10] sm:$0xf]
    %v37 = vld [vmem:[%s1 + $0x14] sm:$0xf]
    %v38 = vld [vmem:[%s1 + $0x18] sm:$0xf]
    %v39 = vld [vmem:[%s1 + $0x1c] sm:$0xf]
    %v40 = vld [vmem:[%s2] sm:$0x1]
    %v42 = vlaneseq
    %v43 = vshrl.u32 %v42, 7
    %v44 = vsub.s32 0, %v43
    %v45 = vrot.slane %v40, %v44
    %v63 = vunpack.c.l.b16 %v16
    %v64 = vunpack.c.l.b16 %v17
    %v65 = vunpack.c.l.b16 %v18
    %v66 = vunpack.c.l.b16 %v19
    %v67 = vunpack.c.l.b16 %v20
    %v68 = vunpack.c.l.b16 %v21
    %v69 = vunpack.c.l.b16 %v22
    %v70 = vunpack.c.l.b16 %v23
    %v71 = vunpack.c.l.b16 %v24
    %v72 = vunpack.c.l.b16 %v25
    %v73 = vunpack.c.l.b16 %v26
    %v74 = vunpack.c.l.b16 %v27
    %v75 = vunpack.c.l.b16 %v28
    %v76 = vunpack.c.l.b16 %v29
    %v77 = vunpack.c.l.b16 %v30
    %v78 = vunpack.c.l.b16 %v31
    %v79 = vpack.c.b16 %v64, %v63
    %v80 = vpack.c.b16 %v66, %v65
    %v81 = vpack.c.b16 %v68, %v67
    %v82 = vpack.c.b16 %v70, %v69
    %v83 = vpack.c.b16 %v72, %v71
    %v84 = vpack.c.b16 %v74, %v73
    %v85 = vpack.c.b16 %v76, %v75
    %v86 = vpack.c.b16 %v78, %v77
    %v95 = vunpack.c.l.b16 %v32
    %v96 = vunpack.c.l.b16 %v33
    %v97 = vunpack.c.l.b16 %v34
    %v98 = vunpack.c.l.b16 %v35
    %v99 = vunpack.c.l.b16 %v36
    %v100 = vunpack.c.l.b16 %v37
    %v101 = vunpack.c.l.b16 %v38
    %v102 = vunpack.c.l.b16 %v39
    %v103 = vpack.c.b16 %v96, %v95
    %v104 = vpack.c.b16 %v98, %v97
    %v105 = vpack.c.b16 %v100, %v99
    %v106 = vpack.c.b16 %v102, %v101
    %vm111 = vcmask 523264
    %v113 = vsel %vm111, %v79, 0
    %v116 = vsel %vm111, %v80, 0
    %v119 = vsel %vm111, %v81, 0
    %v122 = vsel %vm111, %v82, 0
    %v125 = vsel %vm111, %v83, 0
    %v128 = vsel %vm111, %v84, 0
    %v131 = vsel %vm111, %v85, 0
    %v134 = vsel %vm111, %v86, 0
    %136 = vmatprep.subr.bf16.mxu0 0
    %137 = vmatpush1.bf16.msra.mxu0 %v103
    %138 = vmatprep.subr.bf16.mxu0 0
    %139 = vmatpush1.bf16.msra.mxu0 %v104
    %140 = vmatprep.subr.bf16.mxu0 0
    %141 = vmatpush1.bf16.msra.mxu0 %v105
    %142 = vmatprep.subr.bf16.mxu0 0
    %143 = vmatpush1.bf16.msra.mxu0 %v106
    %144 = vmatprep.subr.bf16.mxu0 0
    %145 = vmatpush1.bf16.msra.mxu0 0
    %146 = vmatprep.subr.bf16.mxu0 0
    %147 = vmatpush1.bf16.msra.mxu0 0
    %148 = vmatprep.subr.bf16.mxu0 0
    %149 = vmatpush1.bf16.msra.mxu0 0
    %150 = vmatprep.subr.bf16.mxu0 0
    %151 = vmatpush1.bf16.msra.mxu0 0
    %152 = vmatprep.subr.bf16.mxu0 0
    %153 = vmatpush1.bf16.msra.mxu0 0
    %154 = vmatprep.subr.bf16.mxu0 0
    %155 = vmatpush1.bf16.msra.mxu0 0
    %156 = vmatprep.subr.bf16.mxu0 0
    %157 = vmatpush1.bf16.msra.mxu0 0
    %158 = vmatprep.subr.bf16.mxu0 0
    %159 = vmatpush1.bf16.msra.mxu0 0
    %160 = vmatprep.subr.bf16.mxu0 0
    %161 = vmatpush1.bf16.msra.mxu0 0
    %162 = vmatprep.subr.bf16.mxu0 0
    %163 = vmatpush1.bf16.msra.mxu0 0
    %164 = vmatprep.subr.bf16.mxu0 0
    %165 = vmatpush1.bf16.msra.mxu0 0
    %166 = vmatprep.subr.bf16.mxu0 0
    %167 = vmatpush1.bf16.msra.mxu0 0
    %168 = vmatprep.mubr.bf16.mxu0 0
    %169 = vmatmul.mubr.bf16.gmra.mrb[0].mxu0 %v113
    %v170 = vpop.f32.mrb[0].mxu0
    %v171 = vadd.f32 %v45, %v170
    %v172 = vpop.f32.mrb[0].mxu0
    %v173 = vpop.f32.mrb[0].mxu0
    %v174 = vadd.f32 %v45, %v173
    %v175 = vpop.f32.mrb[0].mxu0
    %176 = vmatprep.mubr.bf16.mxu0 0
    %177 = vmatmul.mubr.bf16.gmra.mrb[0].mxu0 %v116
    %v178 = vpop.f32.mrb[0].mxu0
    %v179 = vadd.f32 %v45, %v178
    %v180 = vpop.f32.mrb[0].mxu0
    %v181 = vpop.f32.mrb[0].mxu0
    %v182 = vadd.f32 %v45, %v181
    %v183 = vpop.f32.mrb[0].mxu0
    %184 = vmatprep.mubr.bf16.mxu0 0
    %185 = vmatmul.mubr.bf16.gmra.mrb[0].mxu0 %v119
    %v186 = vpop.f32.mrb[0].mxu0
    %v187 = vadd.f32 %v45, %v186
    %v188 = vpop.f32.mrb[0].mxu0
    %v189 = vpop.f32.mrb[0].mxu0
    %v190 = vadd.f32 %v45, %v189
    %v191 = vpop.f32.mrb[0].mxu0
    %192 = vmatprep.mubr.bf16.mxu0 0
    %193 = vmatmul.mubr.bf16.gmra.mrb[0].mxu0 %v122
    %v194 = vpop.f32.mrb[0].mxu0
    %v195 = vadd.f32 %v45, %v194
    %v196 = vpop.f32.mrb[0].mxu0
    %v197 = vpop.f32.mrb[0].mxu0
    %v198 = vadd.f32 %v45, %v197
    %v199 = vpop.f32.mrb[0].mxu0
    %200 = vmatprep.mubr.bf16.mxu0 0
    %201 = vmatmul.mubr.bf16.gmra.mrb[0].mxu0 %v125
    %v202 = vpop.f32.mrb[0].mxu0
    %v203 = vadd.f32 %v45, %v202
    %v204 = vpop.f32.mrb[0].mxu0
    %v205 = vpop.f32.mrb[0].mxu0
    %v206 = vadd.f32 %v45, %v205
    %v207 = vpop.f32.mrb[0].mxu0
    %208 = vmatprep.mubr.bf16.mxu0 0
    %209 = vmatmul.mubr.bf16.gmra.mrb[0].mxu0 %v128
    %v210 = vpop.f32.mrb[0].mxu0
    %v211 = vadd.f32 %v45, %v210
    %v212 = vpop.f32.mrb[0].mxu0
    %v213 = vpop.f32.mrb[0].mxu0
    %v214 = vadd.f32 %v45, %v213
    %v215 = vpop.f32.mrb[0].mxu0
    %216 = vmatprep.mubr.bf16.mxu0 0
    %217 = vmatmul.mubr.bf16.gmra.mrb[0].mxu0 %v131
    %v218 = vpop.f32.mrb[0].mxu0
    %v219 = vadd.f32 %v45, %v218
    %v220 = vpop.f32.mrb[0].mxu0
    %v221 = vpop.f32.mrb[0].mxu0
    %v222 = vadd.f32 %v45, %v221
    %v223 = vpop.f32.mrb[0].mxu0
    %224 = vmatprep.mubr.bf16.mxu0 0
    %225 = vmatmul.mubr.bf16.gmra.mrb[0].mxu0 %v134
    %v226 = vpop.f32.mrb[0].mxu0
    %v227 = vadd.f32 %v45, %v226
    %v228 = vpop.f32.mrb[0].mxu0
    %v229 = vpop.f32.mrb[0].mxu0
    %v230 = vadd.f32 %v45, %v229
    %v231 = vpop.f32.mrb[0].mxu0
    %232 = vdwg.mxu0
    %233 = vst [vmem:[#allocation2] sm:$0xff] %v171
    %234 = vst [vmem:[#allocation2 + $0x8] sm:$0xff] %v174
    %235 = vst [vmem:[#allocation2 + $0x10] sm:$0xff] %v179
    %236 = vst [vmem:[#allocation2 + $0x18] sm:$0xff] %v182
    %237 = vst [vmem:[#allocation2 + $0x20] sm:$0xff] %v187
    %238 = vst [vmem:[#allocation2 + $0x28] sm:$0xff] %v190
    %239 = vst [vmem:[#allocation2 + $0x30] sm:$0xff] %v195
    %240 = vst [vmem:[#allocation2 + $0x38] sm:$0xff] %v198
    %241 = vst [vmem:[#allocation2 + $0x40] sm:$0xff] %v203
    %242 = vst [vmem:[#allocation2 + $0x48] sm:$0xff] %v206
    %243 = vst [vmem:[#allocation2 + $0x50] sm:$0xff] %v211
    %244 = vst [vmem:[#allocation2 + $0x58] sm:$0xff] %v214
    %245 = vst [vmem:[#allocation2 + $0x60] sm:$0xff] %v219
    %246 = vst [vmem:[#allocation2 + $0x68] sm:$0xff] %v222
    %247 = vst [vmem:[#allocation2 + $0x70] sm:$0xff] %v227
    %248 = vst [vmem:[#allocation2 + $0x78] sm:$0xff] %v230
    // Predicated region
    $region14: #{tpu_custom_call.1} parent=1 // pred_check
      _
    $region15: #{tpu_custom_call.1} parent=1 // pred_check_branch
      %250 = sbr.rel (0) target = $region17
    $region16: #{tpu_custom_call.1} parent=1 // pred_region
      %s252 = ssub.s32 2048, 2048
      %253 = vsyncadd [#allocation3], %s252
      %s254 = sshll.u32 [#allocation2], 4
      %s255 = int_to_ptr.vmem [resolvable:$true] %s254
      %260 = dma.vmem_to_hbm [thread:$0]  %s255, 2048, %s3, [#allocation3], 128, 128, 8
    $region17: #{tpu_custom_call.1} parent=1 // pred_fallthru
      _
    // Predicated region
    $region18: #{tpu_custom_call.1} parent=1 // pred_check
      _
    $region19: #{tpu_custom_call.1} parent=1 // pred_check_branch
      %262 = sbr.rel (0) target = $region21
    $region20: #{tpu_custom_call.1} parent=1 // pred_region
      %263 = dma.done [#allocation3], 2048
    $region21: #{tpu_custom_call.1} parent=1 // pred_fallthru
      _
    %264 = vsyncpa [#allocation3], 1

</llo_original>
